<compile_context>
chip_gen: v7x
topology: tpu7x:2x2x1
jax: 0.10.0
libtpu: 0.0.40
codegen_flags: <defaults>
</compile_context>

<pallas_src>
import functools
import numpy as np
import jax
import jax.numpy as jnp
from jax.experimental import pallas as pl
from jax.experimental.pallas import tpu as pltpu


# ----------------------------------------------------------------------------
# Fused kernel: conv1x1 -> ReLU -> GAP -> Linear -> (argmax) -> GradCam -> (upsample)
# Single grid step; every input block is the full (tiny) array in VMEM.
# ----------------------------------------------------------------------------
def _gradcam_kernel(S, use_given, do_upsample,
                    x_ref, wc_ref, bc_ref, wl_ref, wlT_ref, bl_ref,
                    pool_ref, wsel_ref, *rest):
    if do_upsample:
        umat_ref, out_ref = rest
    else:
        (out_ref,) = rest

    x = x_ref[...]                                                              # [C, B*S]
    # target-layer activations (conv1x1, stride applied outside)
    A = jnp.dot(wc_ref[...], x, preferred_element_type=jnp.float32) + bc_ref[...]   # [K, B*S]
    mask = (A > 0.0).astype(jnp.float32)                                        # relu mask

    # per-batch spatial mean of the relu mask, via MXU: pool[b*S+s, b] = 1/S
    maskmean = jnp.dot(mask, pool_ref[...], preferred_element_type=jnp.float32)      # [K, B]

    if use_given:
        # user indices: Wl[idx].T was gathered on the host -> no logits needed
        w_sel = wsel_ref[...]                                                   # [K, B]
    else:
        # model head: GAP -> Linear, then first-max argmax (softmax dropped: monotone)
        pooled = jnp.dot(A * mask, pool_ref[...], preferred_element_type=jnp.float32)   # [K, B]
        logits = (jnp.dot(wl_ref[...], pooled, preferred_element_type=jnp.float32)
                  + bl_ref[...])                                                # [NC, B]
        nc = logits.shape[0]
        row_f = jax.lax.broadcasted_iota(jnp.int32, logits.shape, 0).astype(jnp.float32)
        cmax = jnp.max(logits, axis=0, keepdims=True)
        idx_f = jnp.min(jnp.where(logits >= cmax, row_f, float(nc)),
                        axis=0, keepdims=True)                                  # [1, B]
        onehot = (row_f == idx_f).astype(jnp.float32)                           # [NC, B]
        w_sel = jnp.dot(wlT_ref[...], onehot, preferred_element_type=jnp.float32)    # [K, B]

    # captum LayerGradCam weights: alpha[k,b] = Wl[idx_b,k]/S * mean_s(A>0)
    alpha = w_sel * maskmean * (1.0 / S)                                        # [K, B]

    # broadcast alpha over each batch's lane block (alpha_full[k, b*S+s] = alpha[k, b])
    B = alpha.shape[1]
    BS = A.shape[1]
    lane = jax.lax.broadcasted_iota(jnp.int32, (B, BS), 1)
    row = jax.lax.broadcasted_iota(jnp.int32, (B, BS), 0)
    lower = row * S
    eblk = ((lane >= lower) & (lane < lower + S)).astype(jnp.float32)           # [B, B*S]
    alpha_full = jnp.dot(alpha, eblk, preferred_element_type=jnp.float32)       # [K, B*S]

    cam = jnp.maximum(jnp.sum(alpha_full * A, axis=0, keepdims=True), 0.0)      # [1, B*S]

    if do_upsample:
        # bilinear (align_corners=True) upsample of every batch element in one matmul:
        # umat = blockdiag_B( kron(Uh, Uw)^T )  ->  out[0, b*H*W + o] lane-dense slab
        out_ref[...] = jnp.dot(cam, umat_ref[...], preferred_element_type=jnp.float32)
    else:
        out_ref[...] = cam


def _full_spec(shape):
    return pl.BlockSpec(shape, lambda i: (0,) * len(shape))


def _interp_matrix(dst, src):
    """Row-interpolation matrix for 1-D bilinear resize with align_corners=True."""
    U = np.zeros((dst, src), dtype=np.float32)
    if dst == 1 or src == 1:
        U[:, 0] = 1.0
        return U
    for i in range(dst):
        s = i * (src - 1) / (dst - 1)
        i0 = int(np.floor(s))
        i1 = min(i0 + 1, src - 1)
        f = s - i0
        U[i, i0] += 1.0 - f
        U[i, i1] += f
    return U


# ----------------------------------------------------------------------------
# Wrapper
# ----------------------------------------------------------------------------
class GradCamPallas:
    def __init__(self, Wc, bc, Wl, bl, stride=2):
        self.Wc = jnp.asarray(Wc, jnp.float32)                    # [K, C]
        self.bc = jnp.asarray(bc, jnp.float32).reshape(-1, 1)     # [K, 1]
        self.Wl = jnp.asarray(Wl, jnp.float32)                    # [NC, K]
        self.WlT = jnp.asarray(Wl, jnp.float32).T                 # [K, NC]
        self.bl = jnp.asarray(bl, jnp.float32).reshape(-1, 1)     # [NC, 1]
        self.stride = stride
        self._cache = {}

    def _pool_matrix(self, B, S):
        key = ("pool", B, S)
        if key not in self._cache:
            P = np.kron(np.eye(B, dtype=np.float32),
                        np.full((S, 1), 1.0 / S, dtype=np.float32)).astype(np.float32)
            self._cache[key] = jnp.asarray(P)                     # [B*S, B]
        return self._cache[key]

    def _upsample_matrix(self, B, h, w, H, W):
        key = ("up", B, h, w, H, W)
        if key not in self._cache:
            U2dT = np.kron(_interp_matrix(H, h), _interp_matrix(W, w)).T     # [h*w, H*W]
            UU = np.kron(np.eye(B, dtype=np.float32), U2dT).astype(np.float32)  # [B*h*w, B*H*W]
            self._cache[key] = jnp.asarray(UU)
        return self._cache[key]

    def __call__(self, x, indices=None, with_upsample=False):
        x = jnp.asarray(x, jnp.float32)
        B, C, H, W = x.shape
        h, w = H // self.stride, W // self.stride
        S = h * w
        BS = B * S
        K, NC = self.Wc.shape[0], self.Wl.shape[0]

        # stride-2 of the 1x1 conv applied by slicing; XLA fuses slice/transpose/reshape.
        # TODO(synk): at real image sizes fold this subsample into the kernel input DMA
        #             (memory_space=pl.ANY + strided reads) instead of a host-side gather.
        xs = x[:, :, :: self.stride, :: self.stride].reshape(B, C, S)
        x2 = jnp.transpose(xs, (1, 0, 2)).reshape(C, BS)          # [C, B*S] lane-dense

        pool = self._pool_matrix(B, S)                            # [B*S, B]
        use_given = indices is not None
        if use_given:
            idx = jnp.asarray(indices, jnp.int32)
            wsel = jnp.take(self.Wl, idx, axis=0).T               # [K, B] host-side gather
        else:
            wsel = jnp.zeros((K, B), jnp.float32)

        inputs = [x2, self.Wc, self.bc, self.Wl, self.WlT, self.bl, pool, wsel]
        in_specs = [
            _full_spec((C, BS)), _full_spec((K, C)), _full_spec((K, 1)),
            _full_spec((NC, K)), _full_spec((K, NC)), _full_spec((NC, 1)),
            _full_spec((BS, B)), _full_spec((K, B)),
        ]
        if with_upsample:
            umat = self._upsample_matrix(B, h, w, H, W)           # [B*S, B*H*W]
            inputs.append(umat)
            in_specs.append(_full_spec((BS, B * H * W)))
            n_out = B * H * W
        else:
            n_out = BS

        kernel = functools.partial(_gradcam_kernel, S, use_given, with_upsample)
        out = pl.pallas_call(
            kernel,
            out_shape=jax.ShapeDtypeStruct((1, n_out), jnp.float32),
            grid_spec=pltpu.PrefetchScalarGridSpec(
                num_scalar_prefetch=0,
                grid=(1,),                 # whole batch in a single grid step
                in_specs=in_specs,
                out_specs=_full_spec((1, n_out)),
            ),
            compiler_params=pltpu.CompilerParams(dimension_semantics=("arbitrary",)),
        )(*inputs)

        if with_upsample:
            return out.reshape(B, 1, H, W)
        return out.reshape(B, 1, h, w)


# ----------------------------------------------------------------------------
# Pure-numpy reference (same synthetic model), for correctness checking
# ----------------------------------------------------------------------------
def _ref_gradcam(x, Wc, bc, Wl, bl, stride=2, indices=None, with_upsample=False):
    x = np.asarray(x, np.float32)
    Wc, bc, Wl, bl = (np.asarray(a, np.float32) for a in (Wc, bc, Wl, bl))
    B, C, H, W = x.shape
    h, w = H // stride, W // stride
    S = h * w
    xs = x[:, :, ::stride, ::stride].reshape(B, C, S)
    A = np.einsum("kc,bcs->bks", Wc, xs) + bc[None, :, None]
    relu_A = np.maximum(A, 0.0)
    pooled = relu_A.mean(axis=2)                       # [B, K]
    logits = pooled @ Wl.T + bl                        # [B, NC]
    e = np.exp(logits - logits.max(axis=1, keepdims=True))
    probs = e / e.sum(axis=1, keepdims=True)
    idx = probs.argmax(axis=1) if indices is None else np.asarray(indices)
    wsel = Wl[idx]                                     # [B, K]
    grad = wsel[:, :, None] * (A > 0.0) / S
    alpha = grad.mean(axis=2)                          # [B, K]
    cam = np.maximum((alpha[:, :, None] * A).sum(axis=1), 0.0).reshape(B, 1, h, w)
    if with_upsample:
        Uh = _interp_matrix(H, h)
        Uw = _interp_matrix(W, w)
        cam = np.einsum("Hh,bchw,Ww->bcHW", Uh, cam, Uw)
    return cam


# TODO(synk): captum's autograd-hook machinery for arbitrary user models and the cv2-based
#             visualization helpers (featuremaps_to_heatmaps / visualize) have no Pallas
#             equivalent; gradients here are the exact analytic gradients of the synthetic model.

if __name__ == "__main__":
    B, C, H, W = 2, 4, 16, 16
    K, NC = 8, 10

    key = jax.random.PRNGKey(0)
    kx, k1, k2, k3, k4 = jax.random.split(key, 5)
    x = jax.random.uniform(kx, (B, C, H, W), dtype=jnp.float32)
    Wc = (jax.random.normal(k1, (K, C)) * 0.5).astype(jnp.float32)
    bc = (jax.random.normal(k2, (K,)) * 0.1).astype(jnp.float32)
    Wl = (jax.random.normal(k3, (NC, K)) * 0.5).astype(jnp.float32)
    bl = (jax.random.normal(k4, (NC,)) * 0.1).astype(jnp.float32)

    gradcam = GradCamPallas(Wc, bc, Wl, bl, stride=2)

    # default: auto-selected indices, no upsample -> [B, 1, 8, 8]
    out_low = gradcam(x)
    # explicit indices + bilinear upsample -> [B, 1, 16, 16]
    given_idx = jnp.array([1, 3], dtype=jnp.int32)
    out_up = gradcam(x, indices=given_idx, with_upsample=True)
    jax.block_until_ready((out_low, out_up))

    ref_low = _ref_gradcam(np.asarray(x), Wc, bc, Wl, bl)
    ref_up = _ref_gradcam(np.asarray(x), Wc, bc, Wl, bl,
                          indices=np.array([1, 3]), with_upsample=True)

    np.testing.assert_allclose(np.asarray(out_low), ref_low, rtol=2e-2, atol=2e-3)
    np.testing.assert_allclose(np.asarray(out_up), ref_up, rtol=2e-2, atol=2e-3)
    assert out_low.shape == (B, 1, H // 2, W // 2)
    assert out_up.shape == (B, 1, H, W)

    print("KERNEL_OK")
</pallas_src>

<mosaic_0001>
module attributes {stable_mosaic.version = 11 : i64} {
  func.func @_gradcam_kernel(%arg0: i32, %arg1: memref<4x128xf32, #tpu.memory_space<vmem>>, %arg2: memref<8x4xf32, #tpu.memory_space<vmem>>, %arg3: memref<8x1xf32, #tpu.memory_space<vmem>>, %arg4: memref<10x8xf32, #tpu.memory_space<vmem>>, %arg5: memref<8x10xf32, #tpu.memory_space<vmem>>, %arg6: memref<10x1xf32, #tpu.memory_space<vmem>>, %arg7: memref<128x2xf32, #tpu.memory_space<vmem>>, %arg8: memref<8x2xf32, #tpu.memory_space<vmem>>, %arg9: memref<1x128xf32, #tpu.memory_space<vmem>>) attributes {dimension_semantics = [#tpu.dimension_semantics<arbitrary>], iteration_bounds = array<i64: 1>, scalar_prefetch = 0 : i64, scratch_operands = 0 : i64, tpu.core_type = #tpu.core_type<tc>, window_params = [{pipeline_mode = #tpu.pipeline_mode<synchronous>, transform_indices = @transform_0, window_bounds = array<i64: 4, 128>}, {pipeline_mode = #tpu.pipeline_mode<synchronous>, transform_indices = @transform_1, window_bounds = array<i64: 8, 4>}, {pipeline_mode = #tpu.pipeline_mode<synchronous>, transform_indices = @transform_2, window_bounds = array<i64: 8, 1>}, {pipeline_mode = #tpu.pipeline_mode<synchronous>, transform_indices = @transform_3, window_bounds = array<i64: 10, 8>}, {pipeline_mode = #tpu.pipeline_mode<synchronous>, transform_indices = @transform_4, window_bounds = array<i64: 8, 10>}, {pipeline_mode = #tpu.pipeline_mode<synchronous>, transform_indices = @transform_5, window_bounds = array<i64: 10, 1>}, {pipeline_mode = #tpu.pipeline_mode<synchronous>, transform_indices = @transform_6, window_bounds = array<i64: 128, 2>}, {pipeline_mode = #tpu.pipeline_mode<synchronous>, transform_indices = @transform_7, window_bounds = array<i64: 8, 2>}, {pipeline_mode = #tpu.pipeline_mode<synchronous>, transform_indices = @transform_8, window_bounds = array<i64: 1, 128>}]} {
    %c0 = arith.constant 0 : index
    %c0_0 = arith.constant 0 : index
    %0 = vector.load %arg1[%c0, %c0_0] : memref<4x128xf32, #tpu.memory_space<vmem>>, vector<4x128xf32>
    %c0_1 = arith.constant 0 : index
    %c0_2 = arith.constant 0 : index
    %1 = vector.load %arg2[%c0_1, %c0_2] : memref<8x4xf32, #tpu.memory_space<vmem>>, vector<8x4xf32>
    %cst = arith.constant dense<0.000000e+00> : vector<8x128xf32>
    %2 = tpu.matmul %1, %0, %cst {dimension_numbers = #tpu.dot_dimension_numbers<[1], [0], [0], [1], [0, 0, 1, 1], [], []>} : vector<8x4xf32>, vector<4x128xf32>, vector<8x128xf32> -> vector<8x128xf32>
    %c0_3 = arith.constant 0 : index
    %c0_4 = arith.constant 0 : index
    %3 = vector.load %arg3[%c0_3, %c0_4] : memref<8x1xf32, #tpu.memory_space<vmem>>, vector<8x1xf32>
    %4 = vector.broadcast %3 : vector<8x1xf32> to vector<8x128xf32>
    %5 = arith.addf %2, %4 : vector<8x128xf32>
    %cst_5 = arith.constant 0.000000e+00 : f32
    %6 = vector.broadcast %cst_5 : f32 to vector<8x128xf32>
    %7 = arith.cmpf ogt, %5, %6 : vector<8x128xf32>
    %8 = arith.extui %7 : vector<8x128xi1> to vector<8x128xi32>
    %9 = arith.sitofp %8 : vector<8x128xi32> to vector<8x128xf32>
    %c0_6 = arith.constant 0 : index
    %c0_7 = arith.constant 0 : index
    %10 = vector.load %arg7[%c0_6, %c0_7] : memref<128x2xf32, #tpu.memory_space<vmem>>, vector<128x2xf32>
    %cst_8 = arith.constant dense<0.000000e+00> : vector<8x2xf32>
    %11 = tpu.matmul %9, %10, %cst_8 {dimension_numbers = #tpu.dot_dimension_numbers<[1], [0], [0], [1], [0, 0, 1, 1], [], []>} : vector<8x128xf32>, vector<128x2xf32>, vector<8x2xf32> -> vector<8x2xf32>
    %12 = arith.mulf %5, %9 : vector<8x128xf32>
    %c0_9 = arith.constant 0 : index
    %c0_10 = arith.constant 0 : index
    %13 = vector.load %arg7[%c0_9, %c0_10] : memref<128x2xf32, #tpu.memory_space<vmem>>, vector<128x2xf32>
    %cst_11 = arith.constant dense<0.000000e+00> : vector<8x2xf32>
    %14 = tpu.matmul %12, %13, %cst_11 {dimension_numbers = #tpu.dot_dimension_numbers<[1], [0], [0], [1], [0, 0, 1, 1], [], []>} : vector<8x128xf32>, vector<128x2xf32>, vector<8x2xf32> -> vector<8x2xf32>
    %c0_12 = arith.constant 0 : index
    %c0_13 = arith.constant 0 : index
    %15 = vector.load %arg4[%c0_12, %c0_13] : memref<10x8xf32, #tpu.memory_space<vmem>>, vector<10x8xf32>
    %cst_14 = arith.constant dense<0.000000e+00> : vector<10x2xf32>
    %16 = tpu.matmul %15, %14, %cst_14 {dimension_numbers = #tpu.dot_dimension_numbers<[1], [0], [0], [1], [0, 0, 1, 1], [], []>} : vector<10x8xf32>, vector<8x2xf32>, vector<10x2xf32> -> vector<10x2xf32>
    %c0_15 = arith.constant 0 : index
    %c0_16 = arith.constant 0 : index
    %17 = vector.load %arg6[%c0_15, %c0_16] : memref<10x1xf32, #tpu.memory_space<vmem>>, vector<10x1xf32>
    %18 = vector.broadcast %17 : vector<10x1xf32> to vector<10x2xf32>
    %19 = arith.addf %16, %18 : vector<10x2xf32>
    %20 = tpu.iota {dimensions = array<i32: 0>} : vector<10x2xi32>
    %21 = arith.sitofp %20 : vector<10x2xi32> to vector<10x2xf32>
    %cst_17 = arith.constant dense<0xFF800000> : vector<2xf32>
    %22 = vector.multi_reduction <maximumf>, %19, %cst_17 [0] : vector<10x2xf32> to vector<2xf32>
    %23 = vector.shape_cast %22 : vector<2xf32> to vector<1x2xf32>
    %24 = vector.broadcast %23 : vector<1x2xf32> to vector<10x2xf32>
    %25 = arith.cmpf oge, %19, %24 : vector<10x2xf32>
    %cst_18 = arith.constant 1.000000e+01 : f32
    %26 = vector.broadcast %cst_18 : f32 to vector<10x2xf32>
    %27 = arith.select %25, %21, %26 : vector<10x2xi1>, vector<10x2xf32>
    %cst_19 = arith.constant dense<0x7F800000> : vector<2xf32>
    %28 = vector.multi_reduction <minimumf>, %27, %cst_19 [0] : vector<10x2xf32> to vector<2xf32>
    %29 = vector.shape_cast %28 : vector<2xf32> to vector<1x2xf32>
    %30 = vector.broadcast %29 : vector<1x2xf32> to vector<10x2xf32>
    %31 = arith.cmpf oeq, %21, %30 : vector<10x2xf32>
    %32 = arith.extui %31 : vector<10x2xi1> to vector<10x2xi32>
    %33 = arith.sitofp %32 : vector<10x2xi32> to vector<10x2xf32>
    %c0_20 = arith.constant 0 : index
    %c0_21 = arith.constant 0 : index
    %34 = vector.load %arg5[%c0_20, %c0_21] : memref<8x10xf32, #tpu.memory_space<vmem>>, vector<8x10xf32>
    %cst_22 = arith.constant dense<0.000000e+00> : vector<8x2xf32>
    %35 = tpu.matmul %34, %33, %cst_22 {dimension_numbers = #tpu.dot_dimension_numbers<[1], [0], [0], [1], [0, 0, 1, 1], [], []>} : vector<8x10xf32>, vector<10x2xf32>, vector<8x2xf32> -> vector<8x2xf32>
    %36 = arith.mulf %35, %11 : vector<8x2xf32>
    %cst_23 = arith.constant 1.562500e-02 : f32
    %37 = vector.broadcast %cst_23 : f32 to vector<8x2xf32>
    %38 = arith.mulf %36, %37 : vector<8x2xf32>
    %39 = tpu.iota {dimensions = array<i32: 1>} : vector<2x128xi32>
    %40 = tpu.iota {dimensions = array<i32: 0>} : vector<2x128xi32>
    %c64_i32 = arith.constant 64 : i32
    %41 = vector.broadcast %c64_i32 : i32 to vector<2x128xi32>
    %42 = arith.muli %40, %41 : vector<2x128xi32>
    %43 = arith.cmpi sge, %39, %42 : vector<2x128xi32>
    %c64_i32_24 = arith.constant 64 : i32
    %44 = vector.broadcast %c64_i32_24 : i32 to vector<2x128xi32>
    %45 = arith.addi %42, %44 : vector<2x128xi32>
    %46 = arith.cmpi slt, %39, %45 : vector<2x128xi32>
    %47 = arith.andi %43, %46 : vector<2x128xi1>
    %48 = arith.extui %47 : vector<2x128xi1> to vector<2x128xi32>
    %49 = arith.sitofp %48 : vector<2x128xi32> to vector<2x128xf32>
    %cst_25 = arith.constant dense<0.000000e+00> : vector<8x128xf32>
    %50 = tpu.matmul %38, %49, %cst_25 {dimension_numbers = #tpu.dot_dimension_numbers<[1], [0], [0], [1], [0, 0, 1, 1], [], []>} : vector<8x2xf32>, vector<2x128xf32>, vector<8x128xf32> -> vector<8x128xf32>
    %51 = arith.mulf %50, %5 : vector<8x128xf32>
    %cst_26 = arith.constant dense<0.000000e+00> : vector<128xf32>
    %52 = vector.multi_reduction <add>, %51, %cst_26 [0] : vector<8x128xf32> to vector<128xf32>
    %53 = vector.shape_cast %52 : vector<128xf32> to vector<1x128xf32>
    %cst_27 = arith.constant 0.000000e+00 : f32
    %54 = vector.broadcast %cst_27 : f32 to vector<1x128xf32>
    %55 = arith.maximumf %53, %54 : vector<1x128xf32>
    %c0_28 = arith.constant 0 : index
    %c0_29 = arith.constant 0 : index
    %56 = vector.load %arg9[%c0_28, %c0_29] : memref<1x128xf32, #tpu.memory_space<vmem>>, vector<1x128xf32>
    tpu.vector_store %arg9[%c0_28, %c0_29], %55 {strides = array<i32>} : memref<1x128xf32, #tpu.memory_space<vmem>>, vector<1x128xf32>,
    return
  }
  func.func @transform_0(%arg0: i32) -> (i32, i32) {
    %c0_i32 = arith.constant 0 : i32
    %c0_i32_0 = arith.constant 0 : i32
    %c0_i32_1 = arith.constant 0 : i32
    return %c0_i32, %c0_i32_0 : i32, i32
  }
  func.func @transform_1(%arg0: i32) -> (i32, i32) {
    %c0_i32 = arith.constant 0 : i32
    %c0_i32_0 = arith.constant 0 : i32
    %c0_i32_1 = arith.constant 0 : i32
    return %c0_i32, %c0_i32_0 : i32, i32
  }
  func.func @transform_2(%arg0: i32) -> (i32, i32) {
    %c0_i32 = arith.constant 0 : i32
    %c0_i32_0 = arith.constant 0 : i32
    %c0_i32_1 = arith.constant 0 : i32
    return %c0_i32, %c0_i32_0 : i32, i32
  }
  func.func @transform_3(%arg0: i32) -> (i32, i32) {
    %c0_i32 = arith.constant 0 : i32
    %c0_i32_0 = arith.constant 0 : i32
    %c0_i32_1 = arith.constant 0 : i32
    return %c0_i32, %c0_i32_0 : i32, i32
  }
  func.func @transform_4(%arg0: i32) -> (i32, i32) {
    %c0_i32 = arith.constant 0 : i32
    %c0_i32_0 = arith.constant 0 : i32
    %c0_i32_1 = arith.constant 0 : i32
    return %c0_i32, %c0_i32_0 : i32, i32
  }
  func.func @transform_5(%arg0: i32) -> (i32, i32) {
    %c0_i32 = arith.constant 0 : i32
    %c0_i32_0 = arith.constant 0 : i32
    %c0_i32_1 = arith.constant 0 : i32
    return %c0_i32, %c0_i32_0 : i32, i32
  }
  func.func @transform_6(%arg0: i32) -> (i32, i32) {
    %c0_i32 = arith.constant 0 : i32
    %c0_i32_0 = arith.constant 0 : i32
    %c0_i32_1 = arith.constant 0 : i32
    return %c0_i32, %c0_i32_0 : i32, i32
  }
  func.func @transform_7(%arg0: i32) -> (i32, i32) {
    %c0_i32 = arith.constant 0 : i32
    %c0_i32_0 = arith.constant 0 : i32
    %c0_i32_1 = arith.constant 0 : i32
    return %c0_i32, %c0_i32_0 : i32, i32
  }
  func.func @transform_8(%arg0: i32) -> (i32, i32) {
    %c0_i32 = arith.constant 0 : i32
    %c0_i32_0 = arith.constant 0 : i32
    %c0_i32_1 = arith.constant 0 : i32
    return %c0_i32, %c0_i32_0 : i32, i32
  }
}

</mosaic_0001>

<llo_original>
// kernel: tpu_custom_call.1
$region0: #{tpu_custom_call.1}
  #allocation0 [shape = 'u32[]', space=smem, size = 0x4, offset = 0x4, fixed_abs, tag = 'smem constant byte address 0x4 - core index']
  #allocation1 [shape = 'u32[144,128]{1,0:T(1,128)}', space=vmem, size = 0x12000, scoped, tag = 'internal scratch']
  %s0 = inlined_call_operand.vmem [shape: f32[4,128], index: 0, kind: input, shape index: {}]
  %s1 = inlined_call_operand.vmem [shape: f32[8,4], index: 1, kind: input, shape index: {}]
  %s2 = inlined_call_operand.vmem [shape: f32[8,1], index: 2, kind: input, shape index: {}]
  %s3 = inlined_call_operand.vmem [shape: f32[10,8], index: 3, kind: input, shape index: {}]
  %s4 = inlined_call_operand.vmem [shape: f32[8,10], index: 4, kind: input, shape index: {}]
  %s5 = inlined_call_operand.vmem [shape: f32[10,1], index: 5, kind: input, shape index: {}]
  %s6 = inlined_call_operand.vmem [shape: f32[128,2], index: 6, kind: input, shape index: {}]
  %s7 = inlined_call_operand.vmem [shape: f32[8,2], index: 7, kind: input, shape index: {}]
  %s8 = inlined_call_operand.hbm [shape: f32[1,128], index: 8, kind: output, shape index: {}]
  %s9 = sld [smem:[#allocation0]]
  $region42: #{tpu_custom_call.1} parent=0
    _
  %s11 = ssub.s32 1, %s9
  %s12 = scalar_select 0, %s11, %s9
  $region1: #{tpu_custom_call.1} parent=0
    #allocation2 [shape = 'u8[512]{0}', space=vmem, size = 0x400, scoped, tag = 'output window, operand 0, single buffered']
    #allocation3 [shape = 's32[1]{0}', space=sflag, size = 0x4, scoped, tag = 'scoped memory for tpu_custom_call.1']
    %13 = vsyncpa [#allocation3], 0
    // Predicated region
    $region2: #{tpu_custom_call.1} parent=1 // pred_check
      _
    $region3: #{tpu_custom_call.1} parent=1 // pred_check_branch
      %15 = sbr.rel (0) target = $region5
    $region4: #{tpu_custom_call.1} parent=1 // pred_region
      _
    $region5: #{tpu_custom_call.1} parent=1 // pred_fallthru
      _
    // Predicated region
    $region6: #{tpu_custom_call.1} parent=1 // pred_check
      _
    $region7: #{tpu_custom_call.1} parent=1 // pred_check_branch
      %17 = sbr.rel (0) target = $region9
    $region8: #{tpu_custom_call.1} parent=1 // pred_region
      _
    $region9: #{tpu_custom_call.1} parent=1 // pred_fallthru
      _
    // Predicated region
    $region10: #{tpu_custom_call.1} parent=1 // pred_check
      _
    $region11: #{tpu_custom_call.1} parent=1 // pred_check_branch
      %19 = sbr.rel (0) target = $region13
    $region12: #{tpu_custom_call.1} parent=1 // pred_region
      _
    $region13: #{tpu_custom_call.1} parent=1 // pred_fallthru
      _
    // Predicated region
    $region14: #{tpu_custom_call.1} parent=1 // pred_check
      _
    $region15: #{tpu_custom_call.1} parent=1 // pred_check_branch
      %21 = sbr.rel (0) target = $region17
    $region16: #{tpu_custom_call.1} parent=1 // pred_region
      _
    $region17: #{tpu_custom_call.1} parent=1 // pred_fallthru
      _
    // Predicated region
    $region18: #{tpu_custom_call.1} parent=1 // pred_check
      _
    $region19: #{tpu_custom_call.1} parent=1 // pred_check_branch
      %23 = sbr.rel (0) target = $region21
    $region20: #{tpu_custom_call.1} parent=1 // pred_region
      _
    $region21: #{tpu_custom_call.1} parent=1 // pred_fallthru
      _
    // Predicated region
    $region22: #{tpu_custom_call.1} parent=1 // pred_check
      _
    $region23: #{tpu_custom_call.1} parent=1 // pred_check_branch
      %25 = sbr.rel (0) target = $region25
    $region24: #{tpu_custom_call.1} parent=1 // pred_region
      _
    $region25: #{tpu_custom_call.1} parent=1 // pred_fallthru
      _
    // Predicated region
    $region26: #{tpu_custom_call.1} parent=1 // pred_check
      _
    $region27: #{tpu_custom_call.1} parent=1 // pred_check_branch
      %27 = sbr.rel (0) target = $region29
    $region28: #{tpu_custom_call.1} parent=1 // pred_region
      _
    $region29: #{tpu_custom_call.1} parent=1 // pred_fallthru
      _
    // Predicated region
    $region30: #{tpu_custom_call.1} parent=1 // pred_check
      _
    $region31: #{tpu_custom_call.1} parent=1 // pred_check_branch
      %29 = sbr.rel (0) target = $region33
    $region32: #{tpu_custom_call.1} parent=1 // pred_region
      _
    $region33: #{tpu_custom_call.1} parent=1 // pred_fallthru
      _
    %v30 = vld [vmem:[%s0] sm:$0xf]
    %v31 = vld [vmem:[%s1] sm:$0xff]
    %v32 = vld [vmem:[%s2] sm:$0xff]
    %34 = vset.pattern.permute.xlu0 0
    %35 = vperm.xlu0 %34, %v32
    %v36 = vpop.permute.xlu0 %35
    %vm38 = vcmask 31744
    %v40 = vsel %vm38, %v31, 0
    %vm42 = vcmask 1043456
    %v44 = vsel %vm42, %v30, 0
    %46 = vmatprep.subr.mxu0 0.0
    %47 = vmatpush1.msra.mxu0 %v44
    %48 = vmatprep.subr.mxu0 0.0
    %49 = vmatpush1.msra.mxu0 0.0
    %50 = vmatprep.subr.mxu0 0.0
    %51 = vmatpush1.msra.mxu0 0.0
    %52 = vmatprep.subr.mxu0 0.0
    %53 = vmatpush1.msra.mxu0 0.0
    %54 = vmatprep.subr.mxu0 0.0
    %55 = vmatpush1.msra.mxu0 0.0
    %56 = vmatprep.subr.mxu0 0.0
    %57 = vmatpush1.msra.mxu0 0.0
    %58 = vmatprep.subr.mxu0 0.0
    %59 = vmatpush1.msra.mxu0 0.0
    %60 = vmatprep.subr.mxu0 0.0
    %61 = vmatpush1.msra.mxu0 0.0
    %62 = vmatprep.subr.mxu0 0.0
    %63 = vmatpush1.msra.mxu0 0.0
    %64 = vmatprep.subr.mxu0 0.0
    %65 = vmatpush1.msra.mxu0 0.0
    %66 = vmatprep.subr.mxu0 0.0
    %67 = vmatpush1.msra.mxu0 0.0
    %68 = vmatprep.subr.mxu0 0.0
    %69 = vmatpush1.msra.mxu0 0.0
    %70 = vmatprep.subr.mxu0 0.0
    %71 = vmatpush1.msra.mxu0 0.0
    %72 = vmatprep.subr.mxu0 0.0
    %73 = vmatpush1.msra.mxu0 0.0
    %74 = vmatprep.subr.mxu0 0.0
    %75 = vmatpush1.msra.mxu0 0.0
    %76 = vmatprep.subr.mxu0 0.0
    %77 = vmatpush1.msra.mxu0 0.0
    %78 = vmatprep.subr.mxu0 0.0
    %79 = vmatpush1.msra.mxu0 0.0
    %80 = vmatprep.subr.mxu0 0.0
    %81 = vmatpush1.msra.mxu0 0.0
    %82 = vmatprep.subr.mxu0 0.0
    %83 = vmatpush1.msra.mxu0 0.0
    %84 = vmatprep.subr.mxu0 0.0
    %85 = vmatpush1.msra.mxu0 0.0
    %86 = vmatprep.subr.mxu0 0.0
    %87 = vmatpush1.msra.mxu0 0.0
    %88 = vmatprep.subr.mxu0 0.0
    %89 = vmatpush1.msra.mxu0 0.0
    %90 = vmatprep.subr.mxu0 0.0
    %91 = vmatpush1.msra.mxu0 0.0
    %92 = vmatprep.subr.mxu0 0.0
    %93 = vmatpush1.msra.mxu0 0.0
    %94 = vmatprep.subr.mxu0 0.0
    %95 = vmatpush1.msra.mxu0 0.0
    %96 = vmatprep.subr.mxu0 0.0
    %97 = vmatpush1.msra.mxu0 0.0
    %98 = vmatprep.subr.mxu0 0.0
    %99 = vmatpush1.msra.mxu0 0.0
    %100 = vmatprep.subr.mxu0 0.0
    %101 = vmatpush1.msra.mxu0 0.0
    %102 = vmatprep.subr.mxu0 0.0
    %103 = vmatpush1.msra.mxu0 0.0
    %104 = vmatprep.subr.mxu0 0.0
    %105 = vmatpush1.msra.mxu0 0.0
    %106 = vmatprep.subr.mxu0 0.0
    %107 = vmatpush1.msra.mxu0 0.0
    %108 = vmatprep.subr.mxu0 0.0
    %109 = vmatpush1.msra.mxu0 0.0
    %110 = vmatprep.mubr.f32.mxu0 0.0
    %111 = vmatmul.mubr.f32.gmra.mrb[0].mxu0 %v40
    %v112 = vpop.f32.mrb[0].mxu0
    %v113 = vadd.f32 %v36, %v112
    %v114 = vpop.f32.mrb[0].mxu0
    %115 = vdwg.mxu0
    %vm116 = vcmp.gt.f32.partialorder %v113, 0.0
    %v117 = vsel %vm116, 1, 0
    %v118 = vcvt.s32.f32 %v117
    %v119 = vld [vmem:[%s6] sm:$0xff]
    %v120 = vld [vmem:[%s6 + $0x8] sm:$0xff]
    %v121 = vld [vmem:[%s6 + $0x10] sm:$0xff]
    %v122 = vld [vmem:[%s6 + $0x18] sm:$0xff]
    %v123 = vld [vmem:[%s6 + $0x20] sm:$0xff]
    %v124 = vld [vmem:[%s6 + $0x28] sm:$0xff]
    %v125 = vld [vmem:[%s6 + $0x30] sm:$0xff]
    %v126 = vld [vmem:[%s6 + $0x38] sm:$0xff]
    %v127 = vld [vmem:[%s6 + $0x40] sm:$0xff]
    %v128 = vld [vmem:[%s6 + $0x48] sm:$0xff]
    %v129 = vld [vmem:[%s6 + $0x50] sm:$0xff]
    %v130 = vld [vmem:[%s6 + $0x58] sm:$0xff]
    %v131 = vld [vmem:[%s6 + $0x60] sm:$0xff]
    %v132 = vld [vmem:[%s6 + $0x68] sm:$0xff]
    %v133 = vld [vmem:[%s6 + $0x70] sm:$0xff]
    %v134 = vld [vmem:[%s6 + $0x78] sm:$0xff]
    %135 = vmatprep.subr.mxu0 0.0
    %136 = vmatpush1.msra.mxu0 %v119
    %137 = vmatprep.subr.mxu0 0.0
    %138 = vmatpush1.msra.mxu0 %v120
    %139 = vmatprep.subr.mxu0 0.0
    %140 = vmatpush1.msra.mxu0 %v121
    %141 = vmatprep.subr.mxu0 0.0
    %142 = vmatpush1.msra.mxu0 %v122
    %143 = vmatprep.subr.mxu0 0.0
    %144 = vmatpush1.msra.mxu0 %v123
    %145 = vmatprep.subr.mxu0 0.0
    %146 = vmatpush1.msra.mxu0 %v124
    %147 = vmatprep.subr.mxu0 0.0
    %148 = vmatpush1.msra.mxu0 %v125
    %149 = vmatprep.subr.mxu0 0.0
    %150 = vmatpush1.msra.mxu0 %v126
    %151 = vmatprep.subr.mxu0 0.0
    %152 = vmatpush1.msra.mxu0 %v127
    %153 = vmatprep.subr.mxu0 0.0
    %154 = vmatpush1.msra.mxu0 %v128
    %155 = vmatprep.subr.mxu0 0.0
    %156 = vmatpush1.msra.mxu0 %v129
    %157 = vmatprep.subr.mxu0 0.0
    %158 = vmatpush1.msra.mxu0 %v130
    %159 = vmatprep.subr.mxu0 0.0
    %160 = vmatpush1.msra.mxu0 %v131
    %161 = vmatprep.subr.mxu0 0.0
    %162 = vmatpush1.msra.mxu0 %v132
    %163 = vmatprep.subr.mxu0 0.0
    %164 = vmatpush1.msra.mxu0 %v133
    %165 = vmatprep.subr.mxu0 0.0
    %166 = vmatpush1.msra.mxu0 %v134
    %167 = vmatprep.subr.mxu0 0.0
    %168 = vmatpush1.msra.mxu0 0.0
    %169 = vmatprep.subr.mxu0 0.0
    %170 = vmatpush1.msra.mxu0 0.0
    %171 = vmatprep.subr.mxu0 0.0
    %172 = vmatpush1.msra.mxu0 0.0
    %173 = vmatprep.subr.mxu0 0.0
    %174 = vmatpush1.msra.mxu0 0.0
    %175 = vmatprep.subr.mxu0 0.0
    %176 = vmatpush1.msra.mxu0 0.0
    %177 = vmatprep.subr.mxu0 0.0
    %178 = vmatpush1.msra.mxu0 0.0
    %179 = vmatprep.subr.mxu0 0.0
    %180 = vmatpush1.msra.mxu0 0.0
    %181 = vmatprep.subr.mxu0 0.0
    %182 = vmatpush1.msra.mxu0 0.0
    %183 = vmatprep.subr.mxu0 0.0
    %184 = vmatpush1.msra.mxu0 0.0
    %185 = vmatprep.subr.mxu0 0.0
    %186 = vmatpush1.msra.mxu0 0.0
    %187 = vmatprep.subr.mxu0 0.0
    %188 = vmatpush1.msra.mxu0 0.0
    %189 = vmatprep.subr.mxu0 0.0
    %190 = vmatpush1.msra.mxu0 0.0
    %191 = vmatprep.subr.mxu0 0.0
    %192 = vmatpush1.msra.mxu0 0.0
    %193 = vmatprep.subr.mxu0 0.0
    %194 = vmatpush1.msra.mxu0 0.0
    %195 = vmatprep.subr.mxu0 0.0
    %196 = vmatpush1.msra.mxu0 0.0
    %197 = vmatprep.subr.mxu0 0.0
    %198 = vmatpush1.msra.mxu0 0.0
    %199 = vmatprep.mubr.f32.mxu0 0.0
    %200 = vmatmul.mubr.f32.gmra.mrb[0].mxu0 %v118
    %v201 = vpop.f32.mrb[0].mxu0
    %v202 = vadd.f32 0.0, %v201
    %v203 = vpop.f32.mrb[0].mxu0
    %204 = vdwg.mxu0
    %v205 = vmul.f32 %v113, %v118
    %206 = vmatprep.subr.mxu0 0.0
    %207 = vmatpush1.msra.mxu0 %v119
    %208 = vmatprep.subr.mxu0 0.0
    %209 = vmatpush1.msra.mxu0 %v120
    %210 = vmatprep.subr.mxu0 0.0
    %211 = vmatpush1.msra.mxu0 %v121
    %212 = vmatprep.subr.mxu0 0.0
    %213 = vmatpush1.msra.mxu0 %v122
    %214 = vmatprep.subr.mxu0 0.0
    %215 = vmatpush1.msra.mxu0 %v123
    %216 = vmatprep.subr.mxu0 0.0
    %217 = vmatpush1.msra.mxu0 %v124
    %218 = vmatprep.subr.mxu0 0.0
    %219 = vmatpush1.msra.mxu0 %v125
    %220 = vmatprep.subr.mxu0 0.0
    %221 = vmatpush1.msra.mxu0 %v126
    %222 = vmatprep.subr.mxu0 0.0
    %223 = vmatpush1.msra.mxu0 %v127
    %224 = vmatprep.subr.mxu0 0.0
    %225 = vmatpush1.msra.mxu0 %v128
    %226 = vmatprep.subr.mxu0 0.0
    %227 = vmatpush1.msra.mxu0 %v129
    %228 = vmatprep.subr.mxu0 0.0
    %229 = vmatpush1.msra.mxu0 %v130
    %230 = vmatprep.subr.mxu0 0.0
    %231 = vmatpush1.msra.mxu0 %v131
    %232 = vmatprep.subr.mxu0 0.0
    %233 = vmatpush1.msra.mxu0 %v132
    %234 = vmatprep.subr.mxu0 0.0
    %235 = vmatpush1.msra.mxu0 %v133
    %236 = vmatprep.subr.mxu0 0.0
    %237 = vmatpush1.msra.mxu0 %v134
    %238 = vmatprep.subr.mxu0 0.0
    %239 = vmatpush1.msra.mxu0 0.0
    %240 = vmatprep.subr.mxu0 0.0
    %241 = vmatpush1.msra.mxu0 0.0
    %242 = vmatprep.subr.mxu0 0.0
    %243 = vmatpush1.msra.mxu0 0.0
    %244 = vmatprep.subr.mxu0 0.0
    %245 = vmatpush1.msra.mxu0 0.0
    %246 = vmatprep.subr.mxu0 0.0
    %247 = vmatpush1.msra.mxu0 0.0
    %248 = vmatprep.subr.mxu0 0.0
    %249 = vmatpush1.msra.mxu0 0.0
    %250 = vmatprep.subr.mxu0 0.0
    %251 = vmatpush1.msra.mxu0 0.0
    %252 = vmatprep.subr.mxu0 0.0
    %253 = vmatpush1.msra.mxu0 0.0
    %254 = vmatprep.subr.mxu0 0.0
    %255 = vmatpush1.msra.mxu0 0.0
    %256 = vmatprep.subr.mxu0 0.0
    %257 = vmatpush1.msra.mxu0 0.0
    %258 = vmatprep.subr.mxu0 0.0
    %259 = vmatpush1.msra.mxu0 0.0
    %260 = vmatprep.subr.mxu0 0.0
    %261 = vmatpush1.msra.mxu0 0.0
    %262 = vmatprep.subr.mxu0 0.0
    %263 = vmatpush1.msra.mxu0 0.0
    %264 = vmatprep.subr.mxu0 0.0
    %265 = vmatpush1.msra.mxu0 0.0
    %266 = vmatprep.subr.mxu0 0.0
    %267 = vmatpush1.msra.mxu0 0.0
    %268 = vmatprep.subr.mxu0 0.0
    %269 = vmatpush1.msra.mxu0 0.0
    %270 = vmatprep.mubr.f32.mxu0 0.0
    %271 = vmatmul.mubr.f32.gmra.mrb[0].mxu0 %v205
    %v272 = vpop.f32.mrb[0].mxu0
    %v273 = vadd.f32 0.0, %v272
    %v274 = vpop.f32.mrb[0].mxu0
    %275 = vdwg.mxu0
    %v276 = vld [vmem:[%s3] sm:$0xff]
    %v277 = vld [vmem:[%s3 + $0x8] sm:$0x3]
    %v278 = vld [vmem:[%s5] sm:$0xff]
    %v279 = vld [vmem:[%s5 + $0x8] sm:$0x3]
    %281 = vset.pattern.permute.xlu0 0
    %282 = vperm.xlu0 %281, %v278
    %v283 = vpop.permute.xlu0 %282
    %286 = vset.pattern.permute.xlu0 0
    %287 = vperm.xlu0 %286, %v279
    %v288 = vpop.permute.xlu0 %287
    %vm290 = vcmask 64512
    %v292 = vsel %vm290, %v276, 0
    %v295 = vsel %vm290, %v277, 0
    %297 = vmatprep.subr.mxu0 0.0
    %298 = vmatpush1.msra.mxu0 %v273
    %299 = vmatprep.subr.mxu0 0.0
    %300 = vmatpush1.msra.mxu0 0.0
    %301 = vmatprep.subr.mxu0 0.0
    %302 = vmatpush1.msra.mxu0 0.0
    %303 = vmatprep.subr.mxu0 0.0
    %304 = vmatpush1.msra.mxu0 0.0
    %305 = vmatprep.subr.mxu0 0.0
    %306 = vmatpush1.msra.mxu0 0.0
    %307 = vmatprep.subr.mxu0 0.0
    %308 = vmatpush1.msra.mxu0 0.0
    %309 = vmatprep.subr.mxu0 0.0
    %310 = vmatpush1.msra.mxu0 0.0
    %311 = vmatprep.subr.mxu0 0.0
    %312 = vmatpush1.msra.mxu0 0.0
    %313 = vmatprep.subr.mxu0 0.0
    %314 = vmatpush1.msra.mxu0 0.0
    %315 = vmatprep.subr.mxu0 0.0
    %316 = vmatpush1.msra.mxu0 0.0
    %317 = vmatprep.subr.mxu0 0.0
    %318 = vmatpush1.msra.mxu0 0.0
    %319 = vmatprep.subr.mxu0 0.0
    %320 = vmatpush1.msra.mxu0 0.0
    %321 = vmatprep.subr.mxu0 0.0
    %322 = vmatpush1.msra.mxu0 0.0
    %323 = vmatprep.subr.mxu0 0.0
    %324 = vmatpush1.msra.mxu0 0.0
    %325 = vmatprep.subr.mxu0 0.0
    %326 = vmatpush1.msra.mxu0 0.0
    %327 = vmatprep.subr.mxu0 0.0
    %328 = vmatpush1.msra.mxu0 0.0
    %329 = vmatprep.subr.mxu0 0.0
    %330 = vmatpush1.msra.mxu0 0.0
    %331 = vmatprep.subr.mxu0 0.0
    %332 = vmatpush1.msra.mxu0 0.0
    %333 = vmatprep.subr.mxu0 0.0
    %334 = vmatpush1.msra.mxu0 0.0
    %335 = vmatprep.subr.mxu0 0.0
    %336 = vmatpush1.msra.mxu0 0.0
    %337 = vmatprep.subr.mxu0 0.0
    %338 = vmatpush1.msra.mxu0 0.0
    %339 = vmatprep.subr.mxu0 0.0
    %340 = vmatpush1.msra.mxu0 0.0
    %341 = vmatprep.subr.mxu0 0.0
    %342 = vmatpush1.msra.mxu0 0.0
    %343 = vmatprep.subr.mxu0 0.0
    %344 = vmatpush1.msra.mxu0 0.0
    %345 = vmatprep.subr.mxu0 0.0
    %346 = vmatpush1.msra.mxu0 0.0
    %347 = vmatprep.subr.mxu0 0.0
    %348 = vmatpush1.msra.mxu0 0.0
    %349 = vmatprep.subr.mxu0 0.0
    %350 = vmatpush1.msra.mxu0 0.0
    %351 = vmatprep.subr.mxu0 0.0
    %352 = vmatpush1.msra.mxu0 0.0
    %353 = vmatprep.subr.mxu0 0.0
    %354 = vmatpush1.msra.mxu0 0.0
    %355 = vmatprep.subr.mxu0 0.0
    %356 = vmatpush1.msra.mxu0 0.0
    %357 = vmatprep.subr.mxu0 0.0
    %358 = vmatpush1.msra.mxu0 0.0
    %359 = vmatprep.subr.mxu0 0.0
    %360 = vmatpush1.msra.mxu0 0.0
    %361 = vmatprep.mubr.f32.mxu0 0.0
    %362 = vmatmul.mubr.f32.gmra.mrb[0].mxu0 %v292
    %v363 = vpop.f32.mrb[0].mxu0
    %v364 = vadd.f32 %v283, %v363
    %v365 = vpop.f32.mrb[0].mxu0
    %366 = vmatprep.mubr.f32.mxu0 0.0
    %367 = vmatmul.mubr.f32.gmra.mrb[0].mxu0 %v295
    %v368 = vpop.f32.mrb[0].mxu0
    %v369 = vadd.f32 %v288, %v368
    %v370 = vpop.f32.mrb[0].mxu0
    %371 = vdwg.mxu0
    %v372 = vlaneseq
    %v373 = vshrl.u32 %v372, 7
    %v374 = vadd.s32 %v373, 8
    %v375 = vcvt.s32.f32 %v373
    %v376 = vcvt.s32.f32 %v374
    %vm377 = vcmask 15360
    %v378 = vsel %vm377, %v364, -inf
    %vm379 = vcmask 9216
    %v380 = vsel %vm379, %v369, -inf
    %v381 = vmax.f32 %v378, %v380
    %v382 = vrot.slane %v381, 4
    %v383 = vmax.f32 %v381, %v382
    %v384 = vrot.slane %v383, 2
    %v385 = vmax.f32 %v383, %v384
    %v386 = vrot.slane %v385, 1
    %v387 = vmax.f32 %v385, %v386
    %vm388 = vcmp.ge.f32.partialorder %v364, %v387
    %vm389 = vcmp.ge.f32.partialorder %v369, %v387
    %v390 = vsel %vm388, %v375, 10.0
    %v391 = vsel %vm389, %v376, 10.0
    %v392 = vsel %vm377, %v390, inf
    %v393 = vsel %vm379, %v391, inf
    %v394 = vmin.f32 %v392, %v393
    %v395 = vrot.slane %v394, 4
    %v396 = vmin.f32 %v394, %v395
    %v397 = vrot.slane %v396, 2
    %v398 = vmin.f32 %v396, %v397
    %v399 = vrot.slane %v398, 1
    %v400 = vmin.f32 %v398, %v399
    %vm401 = vcmp.eq.f32.partialorder %v375, %v400
    %vm402 = vcmp.eq.f32.partialorder %v376, %v400
    %v403 = vsel %vm401, 1, 0
    %v404 = vsel %vm402, 1, 0
    %v405 = vcvt.s32.f32 %v403
    %v406 = vcvt.s32.f32 %v404
    %v407 = vld [vmem:[%s4] sm:$0xff]
    %vm408 = vcmask 80896
    %v410 = vsel %vm408, %v407, 0
    %vm412 = vcmask 1041408
    %v414 = vsel %vm412, %v406, 0
    %416 = vmatprep.subr.mxu0 0.0
    %417 = vmatpush1.msra.mxu0 %v405
    %418 = vmatprep.subr.mxu0 0.0
    %419 = vmatpush1.msra.mxu0 %v414
    %420 = vmatprep.subr.mxu0 0.0
    %421 = vmatpush1.msra.mxu0 0.0
    %422 = vmatprep.subr.mxu0 0.0
    %423 = vmatpush1.msra.mxu0 0.0
    %424 = vmatprep.subr.mxu0 0.0
    %425 = vmatpush1.msra.mxu0 0.0
    %426 = vmatprep.subr.mxu0 0.0
    %427 = vmatpush1.msra.mxu0 0.0
    %428 = vmatprep.subr.mxu0 0.0
    %429 = vmatpush1.msra.mxu0 0.0
    %430 = vmatprep.subr.mxu0 0.0
    %431 = vmatpush1.msra.mxu0 0.0
    %432 = vmatprep.subr.mxu0 0.0
    %433 = vmatpush1.msra.mxu0 0.0
    %434 = vmatprep.subr.mxu0 0.0
    %435 = vmatpush1.msra.mxu0 0.0
    %436 = vmatprep.subr.mxu0 0.0
    %437 = vmatpush1.msra.mxu0 0.0
    %438 = vmatprep.subr.mxu0 0.0
    %439 = vmatpush1.msra.mxu0 0.0
    %440 = vmatprep.subr.mxu0 0.0
    %441 = vmatpush1.msra.mxu0 0.0
    %442 = vmatprep.subr.mxu0 0.0
    %443 = vmatpush1.msra.mxu0 0.0
    %444 = vmatprep.subr.mxu0 0.0
    %445 = vmatpush1.msra.mxu0 0.0
    %446 = vmatprep.subr.mxu0 0.0
    %447 = vmatpush1.msra.mxu0 0.0
    %448 = vmatprep.subr.mxu0 0.0
    %449 = vmatpush1.msra.mxu0 0.0
    %450 = vmatprep.subr.mxu0 0.0
    %451 = vmatpush1.msra.mxu0 0.0
    %452 = vmatprep.subr.mxu0 0.0
    %453 = vmatpush1.msra.mxu0 0.0
    %454 = vmatprep.subr.mxu0 0.0
    %455 = vmatpush1.msra.mxu0 0.0
    %456 = vmatprep.subr.mxu0 0.0
    %457 = vmatpush1.msra.mxu0 0.0
    %458 = vmatprep.subr.mxu0 0.0
    %459 = vmatpush1.msra.mxu0 0.0
    %460 = vmatprep.subr.mxu0 0.0
    %461 = vmatpush1.msra.mxu0 0.0
    %462 = vmatprep.subr.mxu0 0.0
    %463 = vmatpush1.msra.mxu0 0.0
    %464 = vmatprep.subr.mxu0 0.0
    %465 = vmatpush1.msra.mxu0 0.0
    %466 = vmatprep.subr.mxu0 0.0
    %467 = vmatpush1.msra.mxu0 0.0
    %468 = vmatprep.subr.mxu0 0.0
    %469 = vmatpush1.msra.mxu0 0.0
    %470 = vmatprep.subr.mxu0 0.0
    %471 = vmatpush1.msra.mxu0 0.0
    %472 = vmatprep.subr.mxu0 0.0
    %473 = vmatpush1.msra.mxu0 0.0
    %474 = vmatprep.subr.mxu0 0.0
    %475 = vmatpush1.msra.mxu0 0.0
    %476 = vmatprep.subr.mxu0 0.0
    %477 = vmatpush1.msra.mxu0 0.0
    %478 = vmatprep.subr.mxu0 0.0
    %479 = vmatpush1.msra.mxu0 0.0
    %480 = vmatprep.mubr.f32.mxu0 0.0
    %481 = vmatmul.mubr.f32.gmra.mrb[0].mxu0 %v410
    %v482 = vpop.f32.mrb[0].mxu0
    %v483 = vadd.f32 0.0, %v482
    %v484 = vpop.f32.mrb[0].mxu0
    %485 = vdwg.mxu0
    %v486 = vmul.f32 %v483, %v202
    %v487 = vmul.f32 %v486, 0.015625
    %v488 = vlaneseq
    %v489 = vand.u32 %v488, 127
    %v490 = vmul.u32 %v373, 64
    %vm491 = vcmp.ge.s32.totalorder %v489, %v490
    %v492 = vadd.s32 %v490, 64
    %vm493 = vcmp.lt.s32.totalorder %v489, %v492
    %vm494 = vmand %vm491, %vm493
    %v495 = vsel %vm494, 1, 0
    %v496 = vcvt.s32.f32 %v495
    %v498 = vsel %vm377, %v487, 0
    %v501 = vsel %vm412, %v496, 0
    %503 = vmatprep.subr.mxu0 0.0
    %504 = vmatpush1.msra.mxu0 %v501
    %505 = vmatprep.subr.mxu0 0.0
    %506 = vmatpush1.msra.mxu0 0.0
    %507 = vmatprep.subr.mxu0 0.0
    %508 = vmatpush1.msra.mxu0 0.0
    %509 = vmatprep.subr.mxu0 0.0
    %510 = vmatpush1.msra.mxu0 0.0
    %511 = vmatprep.subr.mxu0 0.0
    %512 = vmatpush1.msra.mxu0 0.0
    %513 = vmatprep.subr.mxu0 0.0
    %514 = vmatpush1.msra.mxu0 0.0
    %515 = vmatprep.subr.mxu0 0.0
    %516 = vmatpush1.msra.mxu0 0.0
    %517 = vmatprep.subr.mxu0 0.0
    %518 = vmatpush1.msra.mxu0 0.0
    %519 = vmatprep.subr.mxu0 0.0
    %520 = vmatpush1.msra.mxu0 0.0
    %521 = vmatprep.subr.mxu0 0.0
    %522 = vmatpush1.msra.mxu0 0.0
    %523 = vmatprep.subr.mxu0 0.0
    %524 = vmatpush1.msra.mxu0 0.0
    %525 = vmatprep.subr.mxu0 0.0
    %526 = vmatpush1.msra.mxu0 0.0
    %527 = vmatprep.subr.mxu0 0.0
    %528 = vmatpush1.msra.mxu0 0.0
    %529 = vmatprep.subr.mxu0 0.0
    %530 = vmatpush1.msra.mxu0 0.0
    %531 = vmatprep.subr.mxu0 0.0
    %532 = vmatpush1.msra.mxu0 0.0
    %533 = vmatprep.subr.mxu0 0.0
    %534 = vmatpush1.msra.mxu0 0.0
    %535 = vmatprep.subr.mxu0 0.0
    %536 = vmatpush1.msra.mxu0 0.0
    %537 = vmatprep.subr.mxu0 0.0
    %538 = vmatpush1.msra.mxu0 0.0
    %539 = vmatprep.subr.mxu0 0.0
    %540 = vmatpush1.msra.mxu0 0.0
    %541 = vmatprep.subr.mxu0 0.0
    %542 = vmatpush1.msra.mxu0 0.0
    %543 = vmatprep.subr.mxu0 0.0
    %544 = vmatpush1.msra.mxu0 0.0
    %545 = vmatprep.subr.mxu0 0.0
    %546 = vmatpush1.msra.mxu0 0.0
    %547 = vmatprep.subr.mxu0 0.0
    %548 = vmatpush1.msra.mxu0 0.0
    %549 = vmatprep.subr.mxu0 0.0
    %550 = vmatpush1.msra.mxu0 0.0
    %551 = vmatprep.subr.mxu0 0.0
    %552 = vmatpush1.msra.mxu0 0.0
    %553 = vmatprep.subr.mxu0 0.0
    %554 = vmatpush1.msra.mxu0 0.0
    %555 = vmatprep.subr.mxu0 0.0
    %556 = vmatpush1.msra.mxu0 0.0
    %557 = vmatprep.subr.mxu0 0.0
    %558 = vmatpush1.msra.mxu0 0.0
    %559 = vmatprep.subr.mxu0 0.0
    %560 = vmatpush1.msra.mxu0 0.0
    %561 = vmatprep.subr.mxu0 0.0
    %562 = vmatpush1.msra.mxu0 0.0
    %563 = vmatprep.subr.mxu0 0.0
    %564 = vmatpush1.msra.mxu0 0.0
    %565 = vmatprep.subr.mxu0 0.0
    %566 = vmatpush1.msra.mxu0 0.0
    %567 = vmatprep.mubr.f32.mxu0 0.0
    %568 = vmatmul.mubr.f32.gmra.mrb[0].mxu0 %v498
    %v569 = vpop.f32.mrb[0].mxu0
    %v570 = vadd.f32 0.0, %v569
    %v571 = vpop.f32.mrb[0].mxu0
    %572 = vdwg.mxu0
    %v573 = vmul.f32 %v570, %v113
    %v574 = vrot.slane %v573, 4
    %v575 = vadd.f32 %v573, %v574
    %v576 = vrot.slane %v575, 2
    %v577 = vadd.f32 %v575, %v576
    %v578 = vrot.slane %v577, 1
    %v579 = vadd.f32 %v577, %v578
    %v580 = vmax.f32 %v579, 0.0
    %581 = vst [vmem:[#allocation2] sm:$0x1] %v580
    // Predicated region
    $region34: #{tpu_custom_call.1} parent=1 // pred_check
      _
    $region35: #{tpu_custom_call.1} parent=1 // pred_check_branch
      %583 = sbr.rel (0) target = $region37
    $region36: #{tpu_custom_call.1} parent=1 // pred_region
      %s585 = ssub.s32 16, 16
      %586 = vsyncadd [#allocation3], %s585
      %s588 = sshll.u32 [#allocation2], 4
      %s589 = int_to_ptr.vmem [resolvable:$true] %s588
      %591 = dma.vmem_to_hbm [thread:$0]  %s589, 16, %s8, [#allocation3]
    $region37: #{tpu_custom_call.1} parent=1 // pred_fallthru
      _
    // Predicated region
    $region38: #{tpu_custom_call.1} parent=1 // pred_check
      _
    $region39: #{tpu_custom_call.1} parent=1 // pred_check_branch
      %593 = sbr.rel (0) target = $region41
    $region40: #{tpu_custom_call.1} parent=1 // pred_region
      %594 = dma.done [#allocation3], 16
    $region41: #{tpu_custom_call.1} parent=1 // pred_fallthru
      _
    %595 = vsyncpa [#allocation3], 1

</llo_original>
